<compile_context>
chip_gen: v5e
topology: v5e:2x2
jax: 0.10.0
libtpu: 0.0.40
codegen_flags: <defaults>
</compile_context>

<pallas_src>
import functools
import math

import jax
import jax.numpy as jnp
from jax.experimental import pallas as pl
from jax.experimental.pallas import tpu as pltpu


def _iou_sums_kernel(out_ref, tgt_ref, inter_ref, union_ref, *,
                     target_thresh, hw, hw_tile):
    """Processes one (rows_tile, hw_tile) chunk per grid step.

    Grid = (row_tiles, hw_tiles).  The spatial (hw) axis is the last,
    "arbitrary" reduction axis; per-row partial sums accumulate directly in the
    resident output blocks (same output block index across the hw axis).
    """
    k = pl.program_id(1)

    @pl.when(k == 0)
    def _():
        inter_ref[...] = jnp.zeros_like(inter_ref)
        union_ref[...] = jnp.zeros_like(union_ref)

    outs = out_ref[...]                          # (rows_tile, hw_tile), native dtype
    mask = tgt_ref[...] > target_thresh          # binarize targets only
    zero = jnp.zeros((), dtype=outs.dtype)
    one = jnp.ones((), dtype=outs.dtype)

    # With t_bin in {0,1}:
    #   outs * t_bin              == where(t_bin, outs, 0)
    #   outs + t_bin - outs*t_bin == where(t_bin, 1, outs)
    inter_part = jnp.where(mask, outs, zero)
    union_part = jnp.where(mask, one, outs)

    if hw % hw_tile != 0:
        # Static: spatial axis does not align to the tile.  The last hw block
        # reads past the array edge (undefined lanes); zero them out so they
        # contribute nothing to intersection or union.  No-op for inner blocks.
        col = k * hw_tile + jax.lax.broadcasted_iota(jnp.int32, outs.shape, 1)
        valid = col < hw
        inter_part = jnp.where(valid, inter_part, zero)
        union_part = jnp.where(valid, union_part, zero)

    inter_ref[...] += jnp.sum(inter_part.astype(jnp.float32), axis=-1, keepdims=True)
    union_ref[...] += jnp.sum(union_part.astype(jnp.float32), axis=-1, keepdims=True)


def abstract_iou_loss(outputs: jax.Array,
                      targets: jax.Array,
                      *,
                      target_thresh: float = 0.0,
                      reduction="mean") -> jax.Array:
    """Soft-IoU loss.  outputs/targets: (..., H, W) or 1D. Returns scalar f32."""
    if outputs.shape != targets.shape:
        raise ValueError("Outputs and labels must have same sizes")
    if outputs.ndim < 1:
        raise ValueError("Output dimension too small; must be at least 1D")

    if outputs.ndim == 1:
        lead = ()
        hw = outputs.shape[0]
    else:
        *lead, h, w = outputs.shape
        hw = h * w
    nc = int(math.prod(lead)) if lead else 1

    # Zero-cost reshape for contiguous inputs: area axes become one lane-dense axis.
    outs2d = outputs.reshape(nc, hw)
    tgts2d = targets.reshape(nc, hw)

    LANE, SUB = 128, 8
    MAX_TILE_ELEMS = 1 << 20          # ~4 MiB per f32 input tile (2 MiB for bf16)

    # Spatial tile: multiple of 128 lanes, capped at 4096; full extent if tiny.
    if hw >= LANE:
        hw_tile = min((hw // LANE) * LANE, 4096)
    else:
        hw_tile = hw
    num_k = pl.cdiv(hw, hw_tile)

    # Row tile: multiple of 8 sublanes, capped so the f32 tile stays <= ~4 MiB.
    if nc >= SUB:
        max_rows = max(SUB, (MAX_TILE_ELEMS // hw_tile) // SUB * SUB)
        rows_tile = min((nc // SUB) * SUB, max_rows)
    else:
        rows_tile = nc
    num_i = pl.cdiv(nc, rows_tile)
    nc_out = num_i * rows_tile        # output rows rounded up; tail rows sliced off

    grid = (num_i, num_k)

    kernel = functools.partial(_iou_sums_kernel,
                               target_thresh=float(target_thresh),
                               hw=hw, hw_tile=hw_tile)

    inter, union = pl.pallas_call(
        kernel,
        out_shape=(jax.ShapeDtypeStruct((nc_out, 1), jnp.float32),
                   jax.ShapeDtypeStruct((nc_out, 1), jnp.float32)),
        grid_spec=pltpu.PrefetchScalarGridSpec(
            num_scalar_prefetch=0,
            grid=grid,
            in_specs=[
                pl.BlockSpec((rows_tile, hw_tile), lambda i, k: (i, k)),
                pl.BlockSpec((rows_tile, hw_tile), lambda i, k: (i, k)),
            ],
            out_specs=[
                pl.BlockSpec((rows_tile, 1), lambda i, k: (i, 0)),
                pl.BlockSpec((rows_tile, 1), lambda i, k: (i, 0)),
            ],
        ),
        compiler_params=pltpu.CompilerParams(
            dimension_semantics=("parallel", "arbitrary"),
            vmem_limit_bytes=32 * 1024 * 1024,
        ),
    )(outs2d, tgts2d)

    inter = inter[:nc, 0]
    union = union[:nc, 0]
    # NOTE: union == 0 (empty outputs + no positive targets) yields NaN/Inf,
    # exactly matching the PyTorch/reference semantics (no epsilon added).
    per_instance = 1.0 - inter / union

    if callable(reduction):
        return reduction(per_instance)
    if reduction == "mean":
        return jnp.mean(per_instance)
    if reduction == "sum":
        return jnp.sum(per_instance)
    raise ValueError(f"Unsupported reduction: {reduction!r}")


def _reference_iou_loss(outputs, targets, target_thresh=0.0, reduction="mean"):
    """Pure-JAX reference mirroring the PyTorch semantics."""
    tgts = (targets > target_thresh).astype(jnp.float32)
    outs = outputs.astype(jnp.float32)
    prod = outs * tgts
    intersection = jnp.sum(prod, axis=(-1, -2))
    union = jnp.sum(outs + tgts - prod, axis=(-1, -2))
    per_instance = 1.0 - intersection / union
    if reduction == "mean":
        return jnp.mean(per_instance)
    return jnp.sum(per_instance)


if __name__ == "__main__":
    key = jax.random.PRNGKey(0)
    k_out, k_tgt = jax.random.split(key)

    N, C, H, W = 2, 4, 16, 16
    # Smooth network outputs in (0, 1); targets centered around target_thresh=0.0.
    outputs = jax.nn.sigmoid(jax.random.normal(k_out, (N, C, H, W), dtype=jnp.float32))
    targets = jax.random.normal(k_tgt, (N, C, H, W), dtype=jnp.float32)

    loss = abstract_iou_loss(outputs, targets, target_thresh=0.0, reduction="mean")
    loss = jax.block_until_ready(loss)

    ref = _reference_iou_loss(outputs, targets, target_thresh=0.0, reduction="mean")
    assert jnp.allclose(loss, ref, rtol=1e-5, atol=1e-5), (loss, ref)

    # Also exercise the "sum" reduction path once (cheap, same data).
    loss_sum = jax.block_until_ready(
        abstract_iou_loss(outputs, targets, target_thresh=0.0, reduction="sum"))
    ref_sum = _reference_iou_loss(outputs, targets, target_thresh=0.0, reduction="sum")
    assert jnp.allclose(loss_sum, ref_sum, rtol=1e-5, atol=1e-5), (loss_sum, ref_sum)

    print("KERNEL_OK")
</pallas_src>

<mosaic_0001>
module attributes {stable_mosaic.version = 11 : i64} {
  func.func @_iou_sums_kernel(%arg0: i32, %arg1: i32, %arg2: memref<8x256xf32, #tpu.memory_space<vmem>>, %arg3: memref<8x256xf32, #tpu.memory_space<vmem>>, %arg4: memref<8x1xf32, #tpu.memory_space<vmem>>, %arg5: memref<8x1xf32, #tpu.memory_space<vmem>>) attributes {dimension_semantics = [#tpu.dimension_semantics<parallel>, #tpu.dimension_semantics<arbitrary>], iteration_bounds = array<i64: 1, 1>, scalar_prefetch = 0 : i64, scratch_operands = 0 : i64, tpu.core_type = #tpu.core_type<tc>, window_params = [{transform_indices = @transform_0, window_bounds = array<i64: 8, 256>}, {transform_indices = @transform_1, window_bounds = array<i64: 8, 256>}, {transform_indices = @transform_2, window_bounds = array<i64: 8, 1>}, {transform_indices = @transform_3, window_bounds = array<i64: 8, 1>}]} {
    %c0_i32 = arith.constant 0 : i32
    %0 = arith.cmpi eq, %arg1, %c0_i32 : i32
    %1 = arith.extui %0 : i1 to i32
    %c0_i32_0 = arith.constant 0 : i32
    %2 = arith.cmpi ne, %1, %c0_i32_0 : i32
    scf.if %2 {
      %cst_16 = arith.constant 0.000000e+00 : f32
      %21 = vector.broadcast %cst_16 : f32 to vector<8x1xf32>
      %c0_17 = arith.constant 0 : index
      %c0_18 = arith.constant 0 : index
      %22 = vector.load %arg4[%c0_17, %c0_18] : memref<8x1xf32, #tpu.memory_space<vmem>>, vector<8x1xf32>
      tpu.vector_store %arg4[%c0_17, %c0_18], %21 {strides = array<i32>} : memref<8x1xf32, #tpu.memory_space<vmem>>, vector<8x1xf32>,
      %cst_19 = arith.constant 0.000000e+00 : f32
      %23 = vector.broadcast %cst_19 : f32 to vector<8x1xf32>
      %c0_20 = arith.constant 0 : index
      %c0_21 = arith.constant 0 : index
      %24 = vector.load %arg5[%c0_20, %c0_21] : memref<8x1xf32, #tpu.memory_space<vmem>>, vector<8x1xf32>
      tpu.vector_store %arg5[%c0_20, %c0_21], %23 {strides = array<i32>} : memref<8x1xf32, #tpu.memory_space<vmem>>, vector<8x1xf32>,
    } else {
    }
    %c0 = arith.constant 0 : index
    %c0_1 = arith.constant 0 : index
    %3 = vector.load %arg2[%c0, %c0_1] : memref<8x256xf32, #tpu.memory_space<vmem>>, vector<8x256xf32>
    %c0_2 = arith.constant 0 : index
    %c0_3 = arith.constant 0 : index
    %4 = vector.load %arg3[%c0_2, %c0_3] : memref<8x256xf32, #tpu.memory_space<vmem>>, vector<8x256xf32>
    %cst = arith.constant 0.000000e+00 : f32
    %5 = vector.broadcast %cst : f32 to vector<8x256xf32>
    %6 = arith.cmpf ogt, %4, %5 : vector<8x256xf32>
    %cst_4 = arith.constant 0.000000e+00 : f32
    %7 = vector.broadcast %cst_4 : f32 to vector<8x256xf32>
    %8 = arith.select %6, %3, %7 : vector<8x256xi1>, vector<8x256xf32>
    %cst_5 = arith.constant 1.000000e+00 : f32
    %9 = vector.broadcast %cst_5 : f32 to vector<8x256xf32>
    %10 = arith.select %6, %9, %3 : vector<8x256xi1>, vector<8x256xf32>
    %c0_6 = arith.constant 0 : index
    %c0_7 = arith.constant 0 : index
    %11 = vector.load %arg4[%c0_6, %c0_7] : memref<8x1xf32, #tpu.memory_space<vmem>>, vector<8x1xf32>
    %cst_8 = arith.constant dense<0.000000e+00> : vector<8xf32>
    %12 = vector.multi_reduction <add>, %8, %cst_8 [1] : vector<8x256xf32> to vector<8xf32>
    %13 = vector.shape_cast %12 : vector<8xf32> to vector<8x1xf32>
    %14 = arith.addf %11, %13 : vector<8x1xf32>
    %c0_9 = arith.constant 0 : index
    %c0_10 = arith.constant 0 : index
    %15 = vector.load %arg4[%c0_9, %c0_10] : memref<8x1xf32, #tpu.memory_space<vmem>>, vector<8x1xf32>
    tpu.vector_store %arg4[%c0_9, %c0_10], %14 {strides = array<i32>} : memref<8x1xf32, #tpu.memory_space<vmem>>, vector<8x1xf32>,
    %c0_11 = arith.constant 0 : index
    %c0_12 = arith.constant 0 : index
    %16 = vector.load %arg5[%c0_11, %c0_12] : memref<8x1xf32, #tpu.memory_space<vmem>>, vector<8x1xf32>
    %cst_13 = arith.constant dense<0.000000e+00> : vector<8xf32>
    %17 = vector.multi_reduction <add>, %10, %cst_13 [1] : vector<8x256xf32> to vector<8xf32>
    %18 = vector.shape_cast %17 : vector<8xf32> to vector<8x1xf32>
    %19 = arith.addf %16, %18 : vector<8x1xf32>
    %c0_14 = arith.constant 0 : index
    %c0_15 = arith.constant 0 : index
    %20 = vector.load %arg5[%c0_14, %c0_15] : memref<8x1xf32, #tpu.memory_space<vmem>>, vector<8x1xf32>
    tpu.vector_store %arg5[%c0_14, %c0_15], %19 {strides = array<i32>} : memref<8x1xf32, #tpu.memory_space<vmem>>, vector<8x1xf32>,
    return
  }
  func.func @transform_0(%arg0: i32, %arg1: i32) -> (i32, i32) {
    %c0_i32 = arith.constant 0 : i32
    return %arg0, %arg1 : i32, i32
  }
  func.func @transform_1(%arg0: i32, %arg1: i32) -> (i32, i32) {
    %c0_i32 = arith.constant 0 : i32
    return %arg0, %arg1 : i32, i32
  }
  func.func @transform_2(%arg0: i32, %arg1: i32) -> (i32, i32) {
    %c0_i32 = arith.constant 0 : i32
    %c0_i32_0 = arith.constant 0 : i32
    return %arg0, %c0_i32 : i32, i32
  }
  func.func @transform_3(%arg0: i32, %arg1: i32) -> (i32, i32) {
    %c0_i32 = arith.constant 0 : i32
    %c0_i32_0 = arith.constant 0 : i32
    return %arg0, %c0_i32 : i32, i32
  }
}

</mosaic_0001>

<llo_original>
// kernel: tpu_custom_call.1
$region0: #{tpu_custom_call.1}
  #allocation0 [shape = 'u32[]', space=smem, size = 0x4, offset = 0x4, fixed_abs, tag = 'smem constant byte address 0x4 - core index']
  #allocation1 [shape = 'u32[72,128]{1,0:T(1,128)}', space=vmem, size = 0x9000, scoped, tag = 'internal scratch']
  %s0 = inlined_call_operand.hbm [shape: f32[8,256], index: 0, kind: input, shape index: {}]
  %s1 = inlined_call_operand.hbm [shape: f32[8,256], index: 1, kind: input, shape index: {}]
  %s2 = inlined_call_operand.vmem [shape: f32[8,1], index: 2, kind: output, shape index: {0}]
  %s3 = inlined_call_operand.vmem [shape: f32[8,1], index: 3, kind: output, shape index: {1}]
  %4 = xla_tuple %s2, %s3
  %s5 = sld [smem:[#allocation0]]
  $region38: #{tpu_custom_call.1} parent=0
    _
  %s7 = ssub.s32 1, %s5
  %s8 = scalar_select 0, %s7, %s5
  $region1: #{tpu_custom_call.1} parent=0
    #allocation2 [shape = 'u8[8192]{0}', space=vmem, size = 0x2000, scoped, tag = 'input window, operand 0, single buffered']
    #allocation3 [shape = 's32[1]{0}', space=sflag, size = 0x4, scoped, tag = 'scoped memory for tpu_custom_call.1']
    #allocation4 [shape = 'u8[8192]{0}', space=vmem, size = 0x2000, scoped, tag = 'input window, operand 1, single buffered']
    #allocation5 [shape = 's32[1]{0}', space=sflag, size = 0x4, scoped, tag = 'scoped memory for tpu_custom_call.1']
    %9 = vsyncpa [#allocation3], 0
    %10 = vsyncpa [#allocation5], 0
    // Predicated region
    $region2: #{tpu_custom_call.1} parent=1 // pred_check
      _
    $region3: #{tpu_custom_call.1} parent=1 // pred_check_branch
      %12 = sbr.rel (0) target = $region5
    $region4: #{tpu_custom_call.1} parent=1 // pred_region
      %14 = vsyncadd [#allocation3], 0
      %s16 = sshll.u32 %s0, 4
      %s17 = int_to_ptr.hbm [resolvable:$true] %s16
      %s18 = sshll.u32 [#allocation2], 4
      %s19 = int_to_ptr.vmem [resolvable:$true] %s18
      %21 = dma.hbm_to_vmem [thread:$0]  %s17, 256, %s19, [#allocation3]
    $region5: #{tpu_custom_call.1} parent=1 // pred_fallthru
      _
    // Predicated region
    $region6: #{tpu_custom_call.1} parent=1 // pred_check
      _
    $region7: #{tpu_custom_call.1} parent=1 // pred_check_branch
      %23 = sbr.rel (0) target = $region9
    $region8: #{tpu_custom_call.1} parent=1 // pred_region
      %25 = vsyncadd [#allocation5], 0
      %s27 = sshll.u32 %s1, 4
      %s28 = int_to_ptr.hbm [resolvable:$true] %s27
      %s29 = sshll.u32 [#allocation4], 4
      %s30 = int_to_ptr.vmem [resolvable:$true] %s29
      %32 = dma.hbm_to_vmem [thread:$0]  %s28, 256, %s30, [#allocation5]
    $region9: #{tpu_custom_call.1} parent=1 // pred_fallthru
      _
    // Predicated region
    $region10: #{tpu_custom_call.1} parent=1 // pred_check
      _
    $region11: #{tpu_custom_call.1} parent=1 // pred_check_branch
      %34 = sbr.rel (0) target = $region13
    $region12: #{tpu_custom_call.1} parent=1 // pred_region
      %36 = dma.done [#allocation3], 256
    $region13: #{tpu_custom_call.1} parent=1 // pred_fallthru
      _
    // Predicated region
    $region14: #{tpu_custom_call.1} parent=1 // pred_check
      _
    $region15: #{tpu_custom_call.1} parent=1 // pred_check_branch
      %38 = sbr.rel (0) target = $region17
    $region16: #{tpu_custom_call.1} parent=1 // pred_region
      %40 = dma.done [#allocation5], 256
    $region17: #{tpu_custom_call.1} parent=1 // pred_fallthru
      _
    %p41 = scmp.eq.s32.totalorder 0, 0
    // Predicated region
    $region18: #{tpu_custom_call.1} parent=1 // pred_check
      %p42 = pneg %p41
    $region19: #{tpu_custom_call.1} parent=1 // pred_check_branch
      %44 = sbr.rel (%p42) target = $region21
    $region20: #{tpu_custom_call.1} parent=1 // pred_region
      %vm45 = vcmask 7168
      %46 = vst.msk [vmem:[%s2] sm:$0xff] %vm45, 0.0
      %47 = vst.msk [vmem:[%s3] sm:$0xff] %vm45, 0.0
    $region21: #{tpu_custom_call.1} parent=1 // pred_fallthru
      _
    %v48 = vld [vmem:[#allocation2] sm:$0xff]
    %v49 = vld [vmem:[#allocation2 + $0x8] sm:$0xff]
    %v50 = vld [vmem:[#allocation4] sm:$0xff]
    %v51 = vld [vmem:[#allocation4 + $0x8] sm:$0xff]
    %vm52 = vcmp.gt.f32.partialorder %v50, 0.0
    %vm53 = vcmp.gt.f32.partialorder %v51, 0.0
    %v54 = vsel %vm52, %v48, 0.0
    %v55 = vsel %vm53, %v49, 0.0
    %v56 = vsel %vm52, 1.0, %v48
    %v57 = vsel %vm53, 1.0, %v49
    %v58 = vld [vmem:[%s2] sm:$0xff]
    %v59 = vadd.f32 %v54, %v55
    %60 = vadd.xlane.f32.xlu0 %v59
    %v61 = vpop.xlane.xlu0 %60
    %v62 = vadd.f32 %v58, %v61
    %vm63 = vcmask 7168
    %64 = vst.msk [vmem:[%s2] sm:$0xff] %vm63, %v62
    %v65 = vld [vmem:[%s3] sm:$0xff]
    %v66 = vadd.f32 %v56, %v57
    %67 = vadd.xlane.f32.xlu0 %v66
    %v68 = vpop.xlane.xlu0 %67
    %v69 = vadd.f32 %v65, %v68
    %70 = vst.msk [vmem:[%s3] sm:$0xff] %vm63, %v69
    // Predicated region
    $region22: #{tpu_custom_call.1} parent=1 // pred_check
      _
    $region23: #{tpu_custom_call.1} parent=1 // pred_check_branch
      %72 = sbr.rel (0) target = $region25
    $region24: #{tpu_custom_call.1} parent=1 // pred_region
      _
    $region25: #{tpu_custom_call.1} parent=1 // pred_fallthru
      _
    // Predicated region
    $region26: #{tpu_custom_call.1} parent=1 // pred_check
      _
    $region27: #{tpu_custom_call.1} parent=1 // pred_check_branch
      %74 = sbr.rel (0) target = $region29
    $region28: #{tpu_custom_call.1} parent=1 // pred_region
      _
    $region29: #{tpu_custom_call.1} parent=1 // pred_fallthru
      _
    // Predicated region
    $region30: #{tpu_custom_call.1} parent=1 // pred_check
      _
    $region31: #{tpu_custom_call.1} parent=1 // pred_check_branch
      %76 = sbr.rel (0) target = $region33
    $region32: #{tpu_custom_call.1} parent=1 // pred_region
      _
    $region33: #{tpu_custom_call.1} parent=1 // pred_fallthru
      _
    // Predicated region
    $region34: #{tpu_custom_call.1} parent=1 // pred_check
      _
    $region35: #{tpu_custom_call.1} parent=1 // pred_check_branch
      %78 = sbr.rel (0) target = $region37
    $region36: #{tpu_custom_call.1} parent=1 // pred_region
      _
    $region37: #{tpu_custom_call.1} parent=1 // pred_fallthru
      _
    %79 = vsyncpa [#allocation3], 1
    %80 = vsyncpa [#allocation5], 1

</llo_original>
